<compile_context>
chip_gen: v7x
topology: tpu7x:2x2x1
jax: 0.10.0
libtpu: 0.0.40
codegen_flags: <defaults>
</compile_context>

<pallas_src>
import functools
import math

import jax
import jax.numpy as jnp
from jax.experimental import pallas as pl
from jax.experimental.pallas import tpu as pltpu


def projector_kernel(x_ref, w_ref, b_ref, o_ref, acc_ref, *, inv_t):
    # x_ref: (B_tile, T_tile, E)   w_ref: (E, C)   b_ref: (1, C)
    # o_ref: (B_tile, C)           acc_ref: (B_tile, E) f32 scratch
    t = pl.program_id(1)

    @pl.when(t == 0)
    def _():
        acc_ref[...] = jnp.zeros_like(acc_ref)

    # Partial sum over this T tile, accumulated in f32 (no explicit tile upcast).
    acc_ref[...] += jnp.sum(x_ref[...], axis=1, dtype=jnp.float32)

    @pl.when(t == pl.num_programs(1) - 1)
    def _():
        mean_h = acc_ref[...] * inv_t                       # (B_tile, E) f32
        z = jnp.dot(mean_h, w_ref[...],
                    preferred_element_type=jnp.float32)     # (B_tile, C) f32
        z = z + b_ref[...].astype(jnp.float32)
        o_ref[...] = z.astype(o_ref.dtype)


def _pick_tile(full, align, max_tile):
    """Largest multiple of `align` that divides `full` and is <= max_tile;
    falls back to the full extent (always legal: block == array dim)."""
    if full <= max_tile:
        return full
    t = (max_tile // align) * align
    while t >= align:
        if full % t == 0:
            return t
        t -= align
    return full


def projector(hidden_states, weight_ec, bias_c):
    """hidden_states: (B, T, E); weight_ec: (E, C); bias_c: (C,) -> (B, C)."""
    B, T, E = hidden_states.shape
    C = weight_ec.shape[1]
    bias_2d = bias_c.reshape(1, C)

    itemsize = jnp.dtype(hidden_states.dtype).itemsize

    # Batch tile: multiple of 8 (or full B) so the (B_tile, C) output block is legal.
    B_tile = _pick_tile(B, 8, 128)
    # Sequence tile: multiple of 8 (or full T); budget ~4 MiB per x buffer.
    max_t_rows = max(8, (4 * 1024 * 1024) // max(1, B_tile * E * itemsize))
    T_tile = _pick_tile(T, 8, max_t_rows)

    grid = (B // B_tile, T // T_tile)

    # Explicit scoped-VMEM budget (covers v5e's 16 MiB default and v7x's 64 MiB
    # physical): x double buffer + resident weight/bias + output + f32 scratch.
    est = (2 * B_tile * T_tile * E * itemsize
           + 2 * E * C * jnp.dtype(weight_ec.dtype).itemsize
           + 2 * C * jnp.dtype(bias_2d.dtype).itemsize
           + 2 * B_tile * C * itemsize
           + B_tile * E * 4)
    vmem_limit = min(100 << 20, max(32 << 20, int(est * 2) + (1 << 20)))

    kernel = functools.partial(projector_kernel, inv_t=1.0 / float(T))

    return pl.pallas_call(
        kernel,
        out_shape=jax.ShapeDtypeStruct((B, C), hidden_states.dtype),
        grid_spec=pltpu.PrefetchScalarGridSpec(
            num_scalar_prefetch=0,
            grid=grid,
            in_specs=[
                pl.BlockSpec((B_tile, T_tile, E), lambda b, t: (b, t, 0)),
                pl.BlockSpec((E, C), lambda b, t: (0, 0)),   # VMEM-resident
                pl.BlockSpec((1, C), lambda b, t: (0, 0)),   # VMEM-resident
            ],
            out_specs=pl.BlockSpec((B_tile, C), lambda b, t: (b, 0)),
            scratch_shapes=[pltpu.VMEM((B_tile, E), jnp.float32)],
        ),
        compiler_params=pltpu.CompilerParams(
            dimension_semantics=("parallel", "arbitrary"),
            vmem_limit_bytes=vmem_limit,
        ),
    )(hidden_states, weight_ec, bias_2d)


if __name__ == "__main__":
    # Small shapes consistent with the module's forward: (B, T, E) -> (B, context_dim)
    # TODO(synk): for production shapes, consider padding C up to a multiple of 128
    # for lane-dense stores / fuller MXU utilization.
    B, T, E, C = 2, 8, 32, 16

    key = jax.random.PRNGKey(0)
    kx, kw, kb = jax.random.split(key, 3)

    hidden_states = jax.random.normal(kx, (B, T, E), dtype=jnp.float32)

    # Deterministic parameter init mimicking nn.Linear: U(-1/sqrt(E), 1/sqrt(E)).
    bound = 1.0 / math.sqrt(E)
    weight_ce = jax.random.uniform(kw, (C, E), minval=-bound, maxval=bound,
                                   dtype=jnp.float32)   # PyTorch layout (C, E)
    weight_ec = weight_ce.T                             # kernel layout (E, C)
    bias_c = jax.random.uniform(kb, (C,), minval=-bound, maxval=bound,
                                dtype=jnp.float32)

    z = projector(hidden_states, weight_ec, bias_c)
    jax.block_until_ready(z)

    # Reference check in plain JAX (same math as the PyTorch forward).
    ref = jnp.mean(hidden_states, axis=1) @ weight_ec + bias_c
    assert z.shape == (B, C)
    assert jnp.allclose(z, ref, atol=1e-5, rtol=1e-5)

    print("KERNEL_OK")
</pallas_src>

<mosaic_0001>
module attributes {stable_mosaic.version = 11 : i64} {
  func.func @projector_kernel(%arg0: i32, %arg1: i32, %arg2: memref<2x8x32xf32, #tpu.memory_space<vmem>>, %arg3: memref<32x16xf32, #tpu.memory_space<vmem>>, %arg4: memref<1x16xf32, #tpu.memory_space<vmem>>, %arg5: memref<2x16xf32, #tpu.memory_space<vmem>>, %arg6: memref<2x32xf32, #tpu.memory_space<vmem>>) attributes {dimension_semantics = [#tpu.dimension_semantics<parallel>, #tpu.dimension_semantics<arbitrary>], iteration_bounds = array<i64: 1, 1>, scalar_prefetch = 0 : i64, scratch_operands = 1 : i64, tpu.core_type = #tpu.core_type<tc>, window_params = [{transform_indices = @transform_0, window_bounds = array<i64: 2, 8, 32>}, {pipeline_mode = #tpu.pipeline_mode<synchronous>, transform_indices = @transform_1, window_bounds = array<i64: 32, 16>}, {pipeline_mode = #tpu.pipeline_mode<synchronous>, transform_indices = @transform_2, window_bounds = array<i64: 1, 16>}, {transform_indices = @transform_3, window_bounds = array<i64: 2, 16>}]} {
    %c0_i32 = arith.constant 0 : i32
    %0 = arith.cmpi eq, %arg1, %c0_i32 : i32
    %1 = arith.extui %0 : i1 to i32
    %c0_i32_0 = arith.constant 0 : i32
    %2 = arith.cmpi ne, %1, %c0_i32_0 : i32
    scf.if %2 {
      %cst_9 = arith.constant 0.000000e+00 : f32
      %11 = vector.broadcast %cst_9 : f32 to vector<2x32xf32>
      %c0_10 = arith.constant 0 : index
      %c0_11 = arith.constant 0 : index
      %12 = vector.load %arg6[%c0_10, %c0_11] : memref<2x32xf32, #tpu.memory_space<vmem>>, vector<2x32xf32>
      tpu.vector_store %arg6[%c0_10, %c0_11], %11 {strides = array<i32>} : memref<2x32xf32, #tpu.memory_space<vmem>>, vector<2x32xf32>,
    } else {
    }
    %c0 = arith.constant 0 : index
    %c0_1 = arith.constant 0 : index
    %3 = vector.load %arg6[%c0, %c0_1] : memref<2x32xf32, #tpu.memory_space<vmem>>, vector<2x32xf32>
    %c0_2 = arith.constant 0 : index
    %c0_3 = arith.constant 0 : index
    %c0_4 = arith.constant 0 : index
    %4 = vector.load %arg2[%c0_2, %c0_3, %c0_4] : memref<2x8x32xf32, #tpu.memory_space<vmem>>, vector<2x8x32xf32>
    %cst = arith.constant dense<0.000000e+00> : vector<2x32xf32>
    %5 = vector.multi_reduction <add>, %4, %cst [1] : vector<2x8x32xf32> to vector<2x32xf32>
    %6 = arith.addf %3, %5 : vector<2x32xf32>
    %c0_5 = arith.constant 0 : index
    %c0_6 = arith.constant 0 : index
    %7 = vector.load %arg6[%c0_5, %c0_6] : memref<2x32xf32, #tpu.memory_space<vmem>>, vector<2x32xf32>
    tpu.vector_store %arg6[%c0_5, %c0_6], %6 {strides = array<i32>} : memref<2x32xf32, #tpu.memory_space<vmem>>, vector<2x32xf32>,
    %c0_i32_7 = arith.constant 0 : i32
    %8 = arith.cmpi eq, %arg1, %c0_i32_7 : i32
    %9 = arith.extui %8 : i1 to i32
    %c0_i32_8 = arith.constant 0 : i32
    %10 = arith.cmpi ne, %9, %c0_i32_8 : i32
    scf.if %10 {
      %c0_9 = arith.constant 0 : index
      %c0_10 = arith.constant 0 : index
      %11 = vector.load %arg6[%c0_9, %c0_10] : memref<2x32xf32, #tpu.memory_space<vmem>>, vector<2x32xf32>
      %cst_11 = arith.constant 1.250000e-01 : f32
      %12 = vector.broadcast %cst_11 : f32 to vector<2x32xf32>
      %13 = arith.mulf %11, %12 : vector<2x32xf32>
      %c0_12 = arith.constant 0 : index
      %c0_13 = arith.constant 0 : index
      %14 = vector.load %arg3[%c0_12, %c0_13] : memref<32x16xf32, #tpu.memory_space<vmem>>, vector<32x16xf32>
      %cst_14 = arith.constant dense<0.000000e+00> : vector<2x16xf32>
      %15 = tpu.matmul %13, %14, %cst_14 {dimension_numbers = #tpu.dot_dimension_numbers<[1], [0], [0], [1], [0, 0, 1, 1], [], []>} : vector<2x32xf32>, vector<32x16xf32>, vector<2x16xf32> -> vector<2x16xf32>
      %c0_15 = arith.constant 0 : index
      %c0_16 = arith.constant 0 : index
      %16 = vector.load %arg4[%c0_15, %c0_16] : memref<1x16xf32, #tpu.memory_space<vmem>>, vector<1x16xf32>
      %17 = vector.broadcast %16 : vector<1x16xf32> to vector<2x16xf32>
      %18 = arith.addf %15, %17 : vector<2x16xf32>
      %c0_17 = arith.constant 0 : index
      %c0_18 = arith.constant 0 : index
      %19 = vector.load %arg5[%c0_17, %c0_18] : memref<2x16xf32, #tpu.memory_space<vmem>>, vector<2x16xf32>
      tpu.vector_store %arg5[%c0_17, %c0_18], %18 {strides = array<i32>} : memref<2x16xf32, #tpu.memory_space<vmem>>, vector<2x16xf32>,
    } else {
    }
    return
  }
  func.func @transform_0(%arg0: i32, %arg1: i32) -> (i32, i32, i32) {
    %c0_i32 = arith.constant 0 : i32
    %c0_i32_0 = arith.constant 0 : i32
    return %arg0, %arg1, %c0_i32 : i32, i32, i32
  }
  func.func @transform_1(%arg0: i32, %arg1: i32) -> (i32, i32) {
    %c0_i32 = arith.constant 0 : i32
    %c0_i32_0 = arith.constant 0 : i32
    %c0_i32_1 = arith.constant 0 : i32
    return %c0_i32, %c0_i32_0 : i32, i32
  }
  func.func @transform_2(%arg0: i32, %arg1: i32) -> (i32, i32) {
    %c0_i32 = arith.constant 0 : i32
    %c0_i32_0 = arith.constant 0 : i32
    %c0_i32_1 = arith.constant 0 : i32
    return %c0_i32, %c0_i32_0 : i32, i32
  }
  func.func @transform_3(%arg0: i32, %arg1: i32) -> (i32, i32) {
    %c0_i32 = arith.constant 0 : i32
    %c0_i32_0 = arith.constant 0 : i32
    return %arg0, %c0_i32 : i32, i32
  }
}

</mosaic_0001>

<llo_original>
// kernel: tpu_custom_call.1
$region0: #{tpu_custom_call.1}
  #allocation0 [shape = 'u32[]', space=smem, size = 0x4, offset = 0x4, fixed_abs, tag = 'smem constant byte address 0x4 - core index']
  #allocation1 [shape = 'u32[144,128]{1,0:T(1,128)}', space=vmem, size = 0x12000, scoped, tag = 'internal scratch']
  #allocation2 [shape = 'f32[2,32]{1,0:T(2,128)}', space=vmem, size = 0x400, scoped, tag = 'scratch operand']
  %s0 = inlined_call_operand.vmem [shape: f32[2,8,32], index: 0, kind: input, shape index: {}]
  %s1 = inlined_call_operand.vmem [shape: f32[32,16], index: 1, kind: input, shape index: {}]
  %s2 = inlined_call_operand.vmem [shape: f32[1,16], index: 2, kind: input, shape index: {}]
  %s3 = inlined_call_operand.hbm [shape: f32[2,16], index: 3, kind: output, shape index: {}]
  %s4 = sld [smem:[#allocation0]]
  $region30: #{tpu_custom_call.1} parent=0
    _
  %s6 = ssub.s32 1, %s4
  %s7 = scalar_select 0, %s6, %s4
  $region1: #{tpu_custom_call.1} parent=0
    #allocation3 [shape = 'u8[1024]{0}', space=vmem, size = 0x400, scoped, tag = 'output window, operand 0, single buffered']
    #allocation4 [shape = 's32[1]{0}', space=sflag, size = 0x4, scoped, tag = 'scoped memory for tpu_custom_call.1']
    %8 = vsyncpa [#allocation4], 0
    // Predicated region
    $region2: #{tpu_custom_call.1} parent=1 // pred_check
      _
    $region3: #{tpu_custom_call.1} parent=1 // pred_check_branch
      %10 = sbr.rel (0) target = $region5
    $region4: #{tpu_custom_call.1} parent=1 // pred_region
      _
    $region5: #{tpu_custom_call.1} parent=1 // pred_fallthru
      _
    // Predicated region
    $region6: #{tpu_custom_call.1} parent=1 // pred_check
      _
    $region7: #{tpu_custom_call.1} parent=1 // pred_check_branch
      %12 = sbr.rel (0) target = $region9
    $region8: #{tpu_custom_call.1} parent=1 // pred_region
      _
    $region9: #{tpu_custom_call.1} parent=1 // pred_fallthru
      _
    // Predicated region
    $region10: #{tpu_custom_call.1} parent=1 // pred_check
      _
    $region11: #{tpu_custom_call.1} parent=1 // pred_check_branch
      %14 = sbr.rel (0) target = $region13
    $region12: #{tpu_custom_call.1} parent=1 // pred_region
      _
    $region13: #{tpu_custom_call.1} parent=1 // pred_fallthru
      _
    %p15 = scmp.eq.s32.totalorder 0, 0
    // Predicated region
    $region14: #{tpu_custom_call.1} parent=1 // pred_check
      %p16 = pneg %p15
    $region15: #{tpu_custom_call.1} parent=1 // pred_check_branch
      %18 = sbr.rel (%p16) target = $region17
    $region16: #{tpu_custom_call.1} parent=1 // pred_region
      %vm19 = vcmask 254976
      %20 = vst.msk [vmem:[#allocation2] sm:$0x3] %vm19, 0.0
    $region17: #{tpu_custom_call.1} parent=1 // pred_fallthru
      _
    %v21 = vld [vmem:[#allocation2] sm:$0x3]
    %v22 = vld [vmem:[%s0] sm:$0xff]
    %v23 = vld [vmem:[%s0 + $0x8] sm:$0xff]
    %vm24 = vcmask 261120
    %v25 = vsel %vm24, %v22, 0.0
    %v26 = vrot.slane %v25, 4
    %v27 = vadd.f32 %v25, %v26
    %v28 = vrot.slane %v27, 2
    %v29 = vadd.f32 %v27, %v28
    %v30 = vrot.slane %v29, 1
    %v31 = vadd.f32 %v29, %v30
    %v32 = vsel %vm24, %v23, 0.0
    %v33 = vrot.slane %v32, 4
    %v34 = vadd.f32 %v32, %v33
    %v35 = vrot.slane %v34, 2
    %v36 = vadd.f32 %v34, %v35
    %v37 = vrot.slane %v36, 1
    %v38 = vadd.f32 %v36, %v37
    %vm41 = vcmask 1041409
    %v42 = vsel %vm41, %v38, %v31
    %v44 = vadd.f32 %v21, %v42
    %vm45 = vcmask 254976
    %46 = vst.msk [vmem:[#allocation2] sm:$0x3] %vm45, %v44
    // Predicated region
    $region18: #{tpu_custom_call.1} parent=1 // pred_check
      %p47 = pneg %p15
    $region19: #{tpu_custom_call.1} parent=1 // pred_check_branch
      %49 = sbr.rel (%p47) target = $region21
    $region20: #{tpu_custom_call.1} parent=1 // pred_region
      %v50 = vld [vmem:[#allocation2] sm:$0x3]
      %v51 = vmul.f32 %v50, 0.125
      %v52 = vld [vmem:[%s1] sm:$0xff]
      %v53 = vld [vmem:[%s1 + $0x8] sm:$0xff]
      %v54 = vld [vmem:[%s1 + $0x10] sm:$0xff]
      %v55 = vld [vmem:[%s1 + $0x18] sm:$0xff]
      %v56 = vld [vmem:[%s2] sm:$0x1]
      %v58 = vlaneseq
      %v59 = vshrl.u32 %v58, 7
      %v60 = vsub.s32 0, %v59
      %v61 = vrot.slane %v56, %v60
      %v64 = vsel %vm24, %v51, 0
      %66 = vmatprep.subr.mxu0 0.0
      %67 = vmatpush1.msra.mxu0 %v52
      %68 = vmatprep.subr.mxu0 0.0
      %69 = vmatpush1.msra.mxu0 %v53
      %70 = vmatprep.subr.mxu0 0.0
      %71 = vmatpush1.msra.mxu0 %v54
      %72 = vmatprep.subr.mxu0 0.0
      %73 = vmatpush1.msra.mxu0 %v55
      %74 = vmatprep.subr.mxu0 0.0
      %75 = vmatpush1.msra.mxu0 0.0
      %76 = vmatprep.subr.mxu0 0.0
      %77 = vmatpush1.msra.mxu0 0.0
      %78 = vmatprep.subr.mxu0 0.0
      %79 = vmatpush1.msra.mxu0 0.0
      %80 = vmatprep.subr.mxu0 0.0
      %81 = vmatpush1.msra.mxu0 0.0
      %82 = vmatprep.subr.mxu0 0.0
      %83 = vmatpush1.msra.mxu0 0.0
      %84 = vmatprep.subr.mxu0 0.0
      %85 = vmatpush1.msra.mxu0 0.0
      %86 = vmatprep.subr.mxu0 0.0
      %87 = vmatpush1.msra.mxu0 0.0
      %88 = vmatprep.subr.mxu0 0.0
      %89 = vmatpush1.msra.mxu0 0.0
      %90 = vmatprep.subr.mxu0 0.0
      %91 = vmatpush1.msra.mxu0 0.0
      %92 = vmatprep.subr.mxu0 0.0
      %93 = vmatpush1.msra.mxu0 0.0
      %94 = vmatprep.subr.mxu0 0.0
      %95 = vmatpush1.msra.mxu0 0.0
      %96 = vmatprep.subr.mxu0 0.0
      %97 = vmatpush1.msra.mxu0 0.0
      %98 = vmatprep.subr.mxu0 0.0
      %99 = vmatpush1.msra.mxu0 0.0
      %100 = vmatprep.subr.mxu0 0.0
      %101 = vmatpush1.msra.mxu0 0.0
      %102 = vmatprep.subr.mxu0 0.0
      %103 = vmatpush1.msra.mxu0 0.0
      %104 = vmatprep.subr.mxu0 0.0
      %105 = vmatpush1.msra.mxu0 0.0
      %106 = vmatprep.subr.mxu0 0.0
      %107 = vmatpush1.msra.mxu0 0.0
      %108 = vmatprep.subr.mxu0 0.0
      %109 = vmatpush1.msra.mxu0 0.0
      %110 = vmatprep.subr.mxu0 0.0
      %111 = vmatpush1.msra.mxu0 0.0
      %112 = vmatprep.subr.mxu0 0.0
      %113 = vmatpush1.msra.mxu0 0.0
      %114 = vmatprep.subr.mxu0 0.0
      %115 = vmatpush1.msra.mxu0 0.0
      %116 = vmatprep.subr.mxu0 0.0
      %117 = vmatpush1.msra.mxu0 0.0
      %118 = vmatprep.subr.mxu0 0.0
      %119 = vmatpush1.msra.mxu0 0.0
      %120 = vmatprep.subr.mxu0 0.0
      %121 = vmatpush1.msra.mxu0 0.0
      %122 = vmatprep.subr.mxu0 0.0
      %123 = vmatpush1.msra.mxu0 0.0
      %124 = vmatprep.subr.mxu0 0.0
      %125 = vmatpush1.msra.mxu0 0.0
      %126 = vmatprep.subr.mxu0 0.0
      %127 = vmatpush1.msra.mxu0 0.0
      %128 = vmatprep.subr.mxu0 0.0
      %129 = vmatpush1.msra.mxu0 0.0
      %130 = vmatprep.mubr.f32.mxu0 0.0
      %131 = vmatmul.mubr.f32.gmra.mrb[0].mxu0 %v64
      %v132 = vpop.f32.mrb[0].mxu0
      %v133 = vadd.f32 %v61, %v132
      %v134 = vpop.f32.mrb[0].mxu0
      %135 = vdwg.mxu0
      %vm136 = vcmask 123904
      %137 = vst.msk [vmem:[#allocation3] sm:$0x3] %vm136, %v133
    $region21: #{tpu_custom_call.1} parent=1 // pred_fallthru
      _
    // Predicated region
    $region22: #{tpu_custom_call.1} parent=1 // pred_check
      _
    $region23: #{tpu_custom_call.1} parent=1 // pred_check_branch
      %139 = sbr.rel (0) target = $region25
    $region24: #{tpu_custom_call.1} parent=1 // pred_region
      %s141 = ssub.s32 32, 32
      %142 = vsyncadd [#allocation4], %s141
      %s144 = sshll.u32 [#allocation3], 4
      %s145 = int_to_ptr.vmem [resolvable:$true] %s144
      %147 = dma.vmem_to_hbm [thread:$0]  %s145, 32, %s3, [#allocation4]
    $region25: #{tpu_custom_call.1} parent=1 // pred_fallthru
      _
    // Predicated region
    $region26: #{tpu_custom_call.1} parent=1 // pred_check
      _
    $region27: #{tpu_custom_call.1} parent=1 // pred_check_branch
      %149 = sbr.rel (0) target = $region29
    $region28: #{tpu_custom_call.1} parent=1 // pred_region
      %150 = dma.done [#allocation4], 32
    $region29: #{tpu_custom_call.1} parent=1 // pred_fallthru
      _
    %151 = vsyncpa [#allocation4], 1

</llo_original>
